<compile_context>
chip_gen: v7x
topology: tpu7x:2x2x1
jax: 0.10.0
libtpu: 0.0.40
codegen_flags: <defaults>
</compile_context>

<pallas_src>
import functools

import jax
import jax.numpy as jnp
from jax.experimental import pallas as pl
from jax.experimental.pallas import tpu as pltpu

# MXU operand dtype: bf16 is the fast MXU path on v5e/v6e/v7x and halves HBM /
# VMEM traffic. Accumulation and all post-matmul elementwise math stay in f32.
# Set to jnp.float32 for bit-closer parity with PyTorch's f32 conv.
_MATMUL_DTYPE = jnp.bfloat16

_BN_EPS = 1e-5
_LRELU_SLOPE = 0.02          # the source module explicitly uses negative_slope=0.02
_LANE = 128
_SUBLANE = 8
_TILE_M = 512                # 512-1024 rows per tile ~ HBM-roofline sweet spot


def _round_up(x, m):
    return ((x + m - 1) // m) * m


def _conv_stats_kernel(x_ref, w_ref, sum_ref, sumsq_ref):
    # x_ref:   (TM, K)   bf16 im2col patches for this M-tile
    # w_ref:   (K, CP)   bf16 weights, Cout zero-padded to CP (resident)
    # sum_ref / sumsq_ref: (8, CP) f32 per-tile partials (row 0 carries the
    #   value; 8 sublanes only so the output block is (8,128)-aligned).
    y = jnp.dot(x_ref[...], w_ref[...], preferred_element_type=jnp.float32)
    s = jnp.sum(y, axis=0, keepdims=True)        # (1, CP)
    ss = jnp.sum(y * y, axis=0, keepdims=True)   # (1, CP)
    sum_ref[...] = jnp.broadcast_to(s, sum_ref.shape)
    sumsq_ref[...] = jnp.broadcast_to(ss, sumsq_ref.shape)


def _conv_apply_kernel(x_ref, w_ref, scale_ref, shift_ref, o_ref):
    # Recompute the conv for this tile (mem-bound: cheaper/simpler than
    # round-tripping a Cout-padded intermediate through HBM), then apply the
    # folded BatchNorm and LeakyReLU, storing only the true-Cout lanes.
    y = jnp.dot(x_ref[...], w_ref[...], preferred_element_type=jnp.float32)
    z = y * scale_ref[...] + shift_ref[...]
    z = jnp.where(z >= 0.0, z, _LRELU_SLOPE * z)
    o_ref[...] = z[:, : o_ref.shape[-1]].astype(o_ref.dtype)


def _im2col_stride2_pad1(x_nhwc, ho, wo):
    """3x3 stride-2 pad-1 patches -> (N*Ho*Wo, 9*Cin), (kh, kw, cin) order."""
    n, _, _, cin = x_nhwc.shape
    xp = jnp.pad(x_nhwc, ((0, 0), (1, 1), (1, 1), (0, 0)))
    cols = []
    for kh in range(3):
        for kw in range(3):
            sl = xp[:, kh:kh + 2 * (ho - 1) + 1:2, kw:kw + 2 * (wo - 1) + 1:2, :]
            cols.append(sl)                        # (N, Ho, Wo, Cin)
    patches = jnp.stack(cols, axis=3)              # (N, Ho, Wo, 9, Cin)
    return patches.reshape(n * ho * wo, 9 * cin)   # (M, K)


@jax.jit
def conv2_forward(x_nchw, weight, gamma, beta):
    """x_nchw: (N, Cin, H, W); weight: (Cout, Cin, 3, 3) (PyTorch layout)."""
    n, cin, h, w = x_nchw.shape
    cout = weight.shape[0]
    ho = (h + 2 - 3) // 2 + 1
    wo = (w + 2 - 3) // 2 + 1
    m = n * ho * wo
    k = 9 * cin
    cout_pad = _round_up(cout, _LANE)

    # ---- XLA glue: layout + patch extraction (bf16) ------------------------
    # TODO(synk): accept/emit NHWC directly to drop these full-tensor
    # transposes; kept NCHW at the boundary for PyTorch-module parity.
    x_nhwc = jnp.transpose(x_nchw, (0, 2, 3, 1)).astype(_MATMUL_DTYPE)
    x_cols = _im2col_stride2_pad1(x_nhwc, ho, wo)                 # (M, K)

    # M tiling: pad M to a tile multiple with exact zeros, so padded rows
    # contribute nothing to sum/sumsq and the stats divide by the true M.
    tm = min(_TILE_M, _round_up(m, _SUBLANE))
    tm = _round_up(tm, _SUBLANE)
    m_pad = _round_up(m, tm)
    n_tiles = m_pad // tm
    if m_pad != m:
        x_cols = jnp.pad(x_cols, ((0, m_pad - m), (0, 0)))

    # Weight: (Cout,Cin,3,3) -> (K, Cout), zero-padded once to lane-dense CP.
    w_mat = jnp.transpose(weight, (2, 3, 1, 0)).reshape(k, cout)
    w_mat = jnp.pad(w_mat, ((0, 0), (0, cout_pad - cout))).astype(_MATMUL_DTYPE)

    bytes_x = m_pad * k * 2
    bytes_w = k * cout_pad * 2
    flops_mm = 2 * m_pad * k * cout_pad

    cparams = pltpu.CompilerParams(
        dimension_semantics=("parallel",),      # M tiles shard across TCs on v7x
        vmem_limit_bytes=48 * 1024 * 1024,      # headroom under v7x's 64 MiB VMEM
    )

    # ---- pass 1: conv matmul + per-channel sum / sum-of-squares ------------
    part_sum, part_sumsq = pl.pallas_call(
        _conv_stats_kernel,
        out_shape=(
            jax.ShapeDtypeStruct((n_tiles, _SUBLANE, cout_pad), jnp.float32),
            jax.ShapeDtypeStruct((n_tiles, _SUBLANE, cout_pad), jnp.float32),
        ),
        grid=(n_tiles,),
        in_specs=[
            pl.BlockSpec((tm, k), lambda i: (i, 0)),
            pl.BlockSpec((k, cout_pad), lambda i: (0, 0)),   # resident weight
        ],
        out_specs=(
            pl.BlockSpec((None, _SUBLANE, cout_pad), lambda i: (i, 0, 0)),
            pl.BlockSpec((None, _SUBLANE, cout_pad), lambda i: (i, 0, 0)),
        ),
        compiler_params=cparams,
        cost_estimate=pl.CostEstimate(
            flops=flops_mm,
            transcendentals=0,
            bytes_accessed=bytes_x + bytes_w
            + 2 * n_tiles * _SUBLANE * cout_pad * 4,
        ),
    )(x_cols, w_mat)

    # ---- fold BatchNorm (global batch stats, biased var) into scale/shift --
    total_sum = jnp.sum(part_sum[:, 0, :cout], axis=0)
    total_sumsq = jnp.sum(part_sumsq[:, 0, :cout], axis=0)
    mean = total_sum / m
    var = jnp.maximum(total_sumsq / m - mean * mean, 0.0)
    scale = gamma.astype(jnp.float32) * jax.lax.rsqrt(var + _BN_EPS)
    shift = beta.astype(jnp.float32) - mean * scale
    scale_p = jnp.pad(scale.reshape(1, cout), ((0, 0), (0, cout_pad - cout)))
    shift_p = jnp.pad(shift.reshape(1, cout), ((0, 0), (0, cout_pad - cout)))

    # ---- pass 2: recompute conv, apply folded BN + LeakyReLU ---------------
    out_flat = pl.pallas_call(
        _conv_apply_kernel,
        out_shape=jax.ShapeDtypeStruct((m_pad, cout), jnp.float32),
        grid=(n_tiles,),
        in_specs=[
            pl.BlockSpec((tm, k), lambda i: (i, 0)),
            pl.BlockSpec((k, cout_pad), lambda i: (0, 0)),
            pl.BlockSpec((1, cout_pad), lambda i: (0, 0)),
            pl.BlockSpec((1, cout_pad), lambda i: (0, 0)),
        ],
        out_specs=pl.BlockSpec((tm, cout), lambda i: (i, 0)),
        compiler_params=cparams,
        cost_estimate=pl.CostEstimate(
            flops=flops_mm + 4 * m_pad * cout_pad,
            transcendentals=0,
            bytes_accessed=bytes_x + bytes_w + m_pad * cout * 4,
        ),
    )(x_cols, w_mat, scale_p, shift_p)

    out_nhwc = out_flat[:m].reshape(n, ho, wo, cout)
    return jnp.transpose(out_nhwc, (0, 3, 1, 2))    # back to NCHW


if __name__ == "__main__":
    key = jax.random.PRNGKey(0)
    k_x, k_w = jax.random.split(key)

    N, Cin, H, W = 2, 4, 16, 16
    Cout = 8

    x = jax.random.normal(k_x, (N, Cin, H, W), dtype=jnp.float32)

    # Deterministic parameter init (shapes as in nn.Conv2d / nn.BatchNorm2d).
    fan_in = Cin * 3 * 3
    bound = 1.0 / (fan_in ** 0.5)
    weight = jax.random.uniform(k_w, (Cout, Cin, 3, 3),
                                minval=-bound, maxval=bound, dtype=jnp.float32)
    gamma = jnp.ones((Cout,), dtype=jnp.float32)   # BN weight init
    beta = jnp.zeros((Cout,), dtype=jnp.float32)   # BN bias init

    out = conv2_forward(x, weight, gamma, beta)
    out = jax.block_until_ready(out)

    assert out.shape == (N, Cout, 8, 8), out.shape
    assert bool(jnp.all(jnp.isfinite(out))), "non-finite output"
    print("KERNEL_OK")
</pallas_src>

<mosaic_0001>
module attributes {stable_mosaic.version = 11 : i64} {
  func.func @_conv_stats_kernel(%arg0: i32, %arg1: memref<128x36xbf16, #tpu.memory_space<vmem>>, %arg2: memref<36x128xbf16, #tpu.memory_space<vmem>>, %arg3: memref<1x8x128xf32, #tpu.memory_space<vmem>>, %arg4: memref<1x8x128xf32, #tpu.memory_space<vmem>>) attributes {dimension_semantics = [#tpu.dimension_semantics<parallel>], iteration_bounds = array<i64: 1>, scalar_prefetch = 0 : i64, scratch_operands = 0 : i64, tpu.core_type = #tpu.core_type<tc>, window_params = [{transform_indices = @transform_0, window_bounds = array<i64: 128, 36>}, {pipeline_mode = #tpu.pipeline_mode<synchronous>, transform_indices = @transform_1, window_bounds = array<i64: 36, 128>}, {transform_indices = @transform_2, window_bounds = array<i64: 1, 8, 128>}, {transform_indices = @transform_3, window_bounds = array<i64: 1, 8, 128>}]} {
    %c0 = arith.constant 0 : index
    %c0_0 = arith.constant 0 : index
    %0 = vector.load %arg1[%c0, %c0_0] : memref<128x36xbf16, #tpu.memory_space<vmem>>, vector<128x36xbf16>
    %c0_1 = arith.constant 0 : index
    %c0_2 = arith.constant 0 : index
    %1 = vector.load %arg2[%c0_1, %c0_2] : memref<36x128xbf16, #tpu.memory_space<vmem>>, vector<36x128xbf16>
    %cst = arith.constant dense<0.000000e+00> : vector<128x128xf32>
    %2 = tpu.matmul %0, %1, %cst {dimension_numbers = #tpu.dot_dimension_numbers<[1], [0], [0], [1], [0, 0, 1, 1], [], []>} : vector<128x36xbf16>, vector<36x128xbf16>, vector<128x128xf32> -> vector<128x128xf32>
    %cst_3 = arith.constant dense<0.000000e+00> : vector<128xf32>
    %3 = vector.multi_reduction <add>, %2, %cst_3 [0] : vector<128x128xf32> to vector<128xf32>
    %4 = vector.shape_cast %3 : vector<128xf32> to vector<1x128xf32>
    %5 = arith.mulf %2, %2 : vector<128x128xf32>
    %cst_4 = arith.constant dense<0.000000e+00> : vector<128xf32>
    %6 = vector.multi_reduction <add>, %5, %cst_4 [0] : vector<128x128xf32> to vector<128xf32>
    %7 = vector.shape_cast %6 : vector<128xf32> to vector<1x128xf32>
    %8 = vector.shape_cast %4 : vector<1x128xf32> to vector<1x128xf32>
    %9 = vector.broadcast %8 : vector<1x128xf32> to vector<8x128xf32>
    %c0_5 = arith.constant 0 : index
    %c0_6 = arith.constant 0 : index
    %c0_7 = arith.constant 0 : index
    %10 = vector.load %arg3[%c0_5, %c0_6, %c0_7] : memref<1x8x128xf32, #tpu.memory_space<vmem>>, vector<1x8x128xf32>
    %11 = vector.shape_cast %10 : vector<1x8x128xf32> to vector<8x128xf32>
    %12 = vector.shape_cast %9 : vector<8x128xf32> to vector<1x8x128xf32>
    tpu.vector_store %arg3[%c0_5, %c0_6, %c0_7], %12 {strides = array<i32>} : memref<1x8x128xf32, #tpu.memory_space<vmem>>, vector<1x8x128xf32>,
    %13 = vector.shape_cast %7 : vector<1x128xf32> to vector<1x128xf32>
    %14 = vector.broadcast %13 : vector<1x128xf32> to vector<8x128xf32>
    %c0_8 = arith.constant 0 : index
    %c0_9 = arith.constant 0 : index
    %c0_10 = arith.constant 0 : index
    %15 = vector.load %arg4[%c0_8, %c0_9, %c0_10] : memref<1x8x128xf32, #tpu.memory_space<vmem>>, vector<1x8x128xf32>
    %16 = vector.shape_cast %15 : vector<1x8x128xf32> to vector<8x128xf32>
    %17 = vector.shape_cast %14 : vector<8x128xf32> to vector<1x8x128xf32>
    tpu.vector_store %arg4[%c0_8, %c0_9, %c0_10], %17 {strides = array<i32>} : memref<1x8x128xf32, #tpu.memory_space<vmem>>, vector<1x8x128xf32>,
    return
  }
  func.func @transform_0(%arg0: i32) -> (i32, i32) {
    %c0_i32 = arith.constant 0 : i32
    %c0_i32_0 = arith.constant 0 : i32
    return %arg0, %c0_i32 : i32, i32
  }
  func.func @transform_1(%arg0: i32) -> (i32, i32) {
    %c0_i32 = arith.constant 0 : i32
    %c0_i32_0 = arith.constant 0 : i32
    %c0_i32_1 = arith.constant 0 : i32
    return %c0_i32, %c0_i32_0 : i32, i32
  }
  func.func @transform_2(%arg0: i32) -> (i32, i32, i32) {
    %c0_i32 = arith.constant 0 : i32
    %c0_i32_0 = arith.constant 0 : i32
    %c0_i32_1 = arith.constant 0 : i32
    return %arg0, %c0_i32, %c0_i32_0 : i32, i32, i32
  }
  func.func @transform_3(%arg0: i32) -> (i32, i32, i32) {
    %c0_i32 = arith.constant 0 : i32
    %c0_i32_0 = arith.constant 0 : i32
    %c0_i32_1 = arith.constant 0 : i32
    return %arg0, %c0_i32, %c0_i32_0 : i32, i32, i32
  }
}

module attributes {stable_mosaic.version = 11 : i64} {
  func.func @_conv_apply_kernel(%arg0: i32, %arg1: memref<128x36xbf16, #tpu.memory_space<vmem>>, %arg2: memref<36x128xbf16, #tpu.memory_space<vmem>>, %arg3: memref<1x128xf32, #tpu.memory_space<vmem>>, %arg4: memref<1x128xf32, #tpu.memory_space<vmem>>, %arg5: memref<128x8xf32, #tpu.memory_space<vmem>>) attributes {dimension_semantics = [#tpu.dimension_semantics<parallel>], iteration_bounds = array<i64: 1>, scalar_prefetch = 0 : i64, scratch_operands = 0 : i64, tpu.core_type = #tpu.core_type<tc>, window_params = [{transform_indices = @transform_0, window_bounds = array<i64: 128, 36>}, {pipeline_mode = #tpu.pipeline_mode<synchronous>, transform_indices = @transform_1, window_bounds = array<i64: 36, 128>}, {pipeline_mode = #tpu.pipeline_mode<synchronous>, transform_indices = @transform_2, window_bounds = array<i64: 1, 128>}, {pipeline_mode = #tpu.pipeline_mode<synchronous>, transform_indices = @transform_3, window_bounds = array<i64: 1, 128>}, {transform_indices = @transform_4, window_bounds = array<i64: 128, 8>}]} {
    %c0 = arith.constant 0 : index
    %c0_0 = arith.constant 0 : index
    %0 = vector.load %arg1[%c0, %c0_0] : memref<128x36xbf16, #tpu.memory_space<vmem>>, vector<128x36xbf16>
    %c0_1 = arith.constant 0 : index
    %c0_2 = arith.constant 0 : index
    %1 = vector.load %arg2[%c0_1, %c0_2] : memref<36x128xbf16, #tpu.memory_space<vmem>>, vector<36x128xbf16>
    %cst = arith.constant dense<0.000000e+00> : vector<128x128xf32>
    %2 = tpu.matmul %0, %1, %cst {dimension_numbers = #tpu.dot_dimension_numbers<[1], [0], [0], [1], [0, 0, 1, 1], [], []>} : vector<128x36xbf16>, vector<36x128xbf16>, vector<128x128xf32> -> vector<128x128xf32>
    %c0_3 = arith.constant 0 : index
    %c0_4 = arith.constant 0 : index
    %3 = vector.load %arg3[%c0_3, %c0_4] : memref<1x128xf32, #tpu.memory_space<vmem>>, vector<1x128xf32>
    %4 = vector.broadcast %3 : vector<1x128xf32> to vector<128x128xf32>
    %5 = arith.mulf %2, %4 : vector<128x128xf32>
    %c0_5 = arith.constant 0 : index
    %c0_6 = arith.constant 0 : index
    %6 = vector.load %arg4[%c0_5, %c0_6] : memref<1x128xf32, #tpu.memory_space<vmem>>, vector<1x128xf32>
    %7 = vector.broadcast %6 : vector<1x128xf32> to vector<128x128xf32>
    %8 = arith.addf %5, %7 : vector<128x128xf32>
    %cst_7 = arith.constant 0.000000e+00 : f32
    %9 = vector.broadcast %cst_7 : f32 to vector<128x128xf32>
    %10 = arith.cmpf oge, %8, %9 : vector<128x128xf32>
    %cst_8 = arith.constant 2.000000e-02 : f32
    %11 = vector.broadcast %cst_8 : f32 to vector<128x128xf32>
    %12 = arith.mulf %11, %8 : vector<128x128xf32>
    %13 = arith.select %10, %8, %12 : vector<128x128xi1>, vector<128x128xf32>
    %14 = vector.extract_strided_slice %13 {offsets = [0, 0], sizes = [128, 8], strides = [1, 1]} : vector<128x128xf32> to vector<128x8xf32>
    %c0_9 = arith.constant 0 : index
    %c0_10 = arith.constant 0 : index
    %15 = vector.load %arg5[%c0_9, %c0_10] : memref<128x8xf32, #tpu.memory_space<vmem>>, vector<128x8xf32>
    tpu.vector_store %arg5[%c0_9, %c0_10], %14 {strides = array<i32>} : memref<128x8xf32, #tpu.memory_space<vmem>>, vector<128x8xf32>,
    return
  }
  func.func @transform_0(%arg0: i32) -> (i32, i32) {
    %c0_i32 = arith.constant 0 : i32
    %c0_i32_0 = arith.constant 0 : i32
    return %arg0, %c0_i32 : i32, i32
  }
  func.func @transform_1(%arg0: i32) -> (i32, i32) {
    %c0_i32 = arith.constant 0 : i32
    %c0_i32_0 = arith.constant 0 : i32
    %c0_i32_1 = arith.constant 0 : i32
    return %c0_i32, %c0_i32_0 : i32, i32
  }
  func.func @transform_2(%arg0: i32) -> (i32, i32) {
    %c0_i32 = arith.constant 0 : i32
    %c0_i32_0 = arith.constant 0 : i32
    %c0_i32_1 = arith.constant 0 : i32
    return %c0_i32, %c0_i32_0 : i32, i32
  }
  func.func @transform_3(%arg0: i32) -> (i32, i32) {
    %c0_i32 = arith.constant 0 : i32
    %c0_i32_0 = arith.constant 0 : i32
    %c0_i32_1 = arith.constant 0 : i32
    return %c0_i32, %c0_i32_0 : i32, i32
  }
  func.func @transform_4(%arg0: i32) -> (i32, i32) {
    %c0_i32 = arith.constant 0 : i32
    %c0_i32_0 = arith.constant 0 : i32
    return %arg0, %c0_i32 : i32, i32
  }
}

</mosaic_0001>

<llo_original>
// kernel: conv2_forward.2
$region0: #{conv2_forward.2}
  #allocation0 [shape = 'u32[]', space=smem, size = 0x4, offset = 0x4, fixed_abs, tag = 'smem constant byte address 0x4 - core index']
  #allocation1 [shape = 'u32[144,128]{1,0:T(1,128)}', space=vmem, size = 0x12000, scoped, tag = 'internal scratch']
  %s0 = inlined_call_operand.vmem [shape: bf16[128,36], index: 0, kind: input, shape index: {}]
  %s1 = inlined_call_operand.vmem [shape: bf16[36,128], index: 1, kind: input, shape index: {}]
  %s2 = inlined_call_operand.vmem [shape: f32[1,8,128], index: 2, kind: output, shape index: {0}]
  %s3 = inlined_call_operand.vmem [shape: f32[1,8,128], index: 3, kind: output, shape index: {1}]
  %4 = xla_tuple %s2, %s3
  %s5 = sld [smem:[#allocation0]]
  $region26: #{conv2_forward.2} parent=0
    _
  %s7 = ssub.s32 1, %s5
  %s8 = scalar_select 0, %s7, %s5
  // Predicated region
  $region2: #{conv2_forward.2} parent=0 // pred_check
    _
  $region3: #{conv2_forward.2} parent=0 // pred_check_branch
    %10 = sbr.rel (0) target = $region5
  $region4: #{conv2_forward.2} parent=0 // pred_region
    _
  $region5: #{conv2_forward.2} parent=0 // pred_fallthru
    _
  // Predicated region
  $region6: #{conv2_forward.2} parent=0 // pred_check
    _
  $region7: #{conv2_forward.2} parent=0 // pred_check_branch
    %12 = sbr.rel (0) target = $region9
  $region8: #{conv2_forward.2} parent=0 // pred_region
    _
  $region9: #{conv2_forward.2} parent=0 // pred_fallthru
    _
  %v14 = vld [vmem:[%s0] sm:$0xf]
  %v15 = vld [vmem:[%s0 + $0x4] sm:$0xf]
  %v16 = vld [vmem:[%s0 + $0x8] sm:$0xf]
  %v17 = vld [vmem:[%s0 + $0xc] sm:$0xf]
  %v18 = vld [vmem:[%s0 + $0x10] sm:$0xf]
  %v19 = vld [vmem:[%s0 + $0x14] sm:$0xf]
  %v20 = vld [vmem:[%s0 + $0x18] sm:$0xf]
  %v21 = vld [vmem:[%s0 + $0x1c] sm:$0xf]
  %v22 = vld [vmem:[%s0 + $0x20] sm:$0xf]
  %v23 = vld [vmem:[%s0 + $0x24] sm:$0xf]
  %v24 = vld [vmem:[%s0 + $0x28] sm:$0xf]
  %v25 = vld [vmem:[%s0 + $0x2c] sm:$0xf]
  %v26 = vld [vmem:[%s0 + $0x30] sm:$0xf]
  %v27 = vld [vmem:[%s0 + $0x34] sm:$0xf]
  %v28 = vld [vmem:[%s0 + $0x38] sm:$0xf]
  %v29 = vld [vmem:[%s0 + $0x3c] sm:$0xf]
  %v30 = vld [vmem:[%s1] sm:$0xf]
  %v31 = vld [vmem:[%s1 + $0x4] sm:$0xf]
  %v32 = vld [vmem:[%s1 + $0x8] sm:$0xf]
  %v33 = vld [vmem:[%s1 + $0xc] sm:$0xf]
  %v34 = vld [vmem:[%s1 + $0x10] sm:$0x3]
  %v51 = vunpack.c.l.b16 %v14
  %v52 = vunpack.c.l.b16 %v15
  %v53 = vunpack.c.l.b16 %v16
  %v54 = vunpack.c.l.b16 %v17
  %v55 = vunpack.c.l.b16 %v18
  %v56 = vunpack.c.l.b16 %v19
  %v57 = vunpack.c.l.b16 %v20
  %v58 = vunpack.c.l.b16 %v21
  %v59 = vunpack.c.l.b16 %v22
  %v60 = vunpack.c.l.b16 %v23
  %v61 = vunpack.c.l.b16 %v24
  %v62 = vunpack.c.l.b16 %v25
  %v63 = vunpack.c.l.b16 %v26
  %v64 = vunpack.c.l.b16 %v27
  %v65 = vunpack.c.l.b16 %v28
  %v66 = vunpack.c.l.b16 %v29
  %v67 = vpack.c.b16 %v52, %v51
  %v68 = vpack.c.b16 %v54, %v53
  %v69 = vpack.c.b16 %v56, %v55
  %v70 = vpack.c.b16 %v58, %v57
  %v71 = vpack.c.b16 %v60, %v59
  %v72 = vpack.c.b16 %v62, %v61
  %v73 = vpack.c.b16 %v64, %v63
  %v74 = vpack.c.b16 %v66, %v65
  %v80 = vunpack.c.l.b16 %v30
  %v81 = vunpack.c.l.b16 %v31
  %v82 = vunpack.c.l.b16 %v32
  %v83 = vunpack.c.l.b16 %v33
  %v84 = vunpack.c.l.b16 %v34
  %v85 = vpack.c.b16 %v81, %v80
  %v86 = vpack.c.b16 %v83, %v82
  %v87 = vpack.c.b16 %v84, %v84
  %vm90 = vcmask 293888
  %v92 = vsel %vm90, %v67, 0
  %v95 = vsel %vm90, %v68, 0
  %v98 = vsel %vm90, %v69, 0
  %v101 = vsel %vm90, %v70, 0
  %v104 = vsel %vm90, %v71, 0
  %v107 = vsel %vm90, %v72, 0
  %v110 = vsel %vm90, %v73, 0
  %v113 = vsel %vm90, %v74, 0
  %vm115 = vcmask 1041408
  %v117 = vsel %vm115, %v87, 0
  %119 = vmatprep.subr.bf16.mxu0 0
  %120 = vmatpush1.bf16.msra.mxu0 %v85
  %121 = vmatprep.subr.bf16.mxu0 0
  %122 = vmatpush1.bf16.msra.mxu0 %v86
  %123 = vmatprep.subr.bf16.mxu0 0
  %124 = vmatpush1.bf16.msra.mxu0 %v117
  %125 = vmatprep.subr.bf16.mxu0 0
  %126 = vmatpush1.bf16.msra.mxu0 0
  %127 = vmatprep.subr.bf16.mxu0 0
  %128 = vmatpush1.bf16.msra.mxu0 0
  %129 = vmatprep.subr.bf16.mxu0 0
  %130 = vmatpush1.bf16.msra.mxu0 0
  %131 = vmatprep.subr.bf16.mxu0 0
  %132 = vmatpush1.bf16.msra.mxu0 0
  %133 = vmatprep.subr.bf16.mxu0 0
  %134 = vmatpush1.bf16.msra.mxu0 0
  %135 = vmatprep.subr.bf16.mxu0 0
  %136 = vmatpush1.bf16.msra.mxu0 0
  %137 = vmatprep.subr.bf16.mxu0 0
  %138 = vmatpush1.bf16.msra.mxu0 0
  %139 = vmatprep.subr.bf16.mxu0 0
  %140 = vmatpush1.bf16.msra.mxu0 0
  %141 = vmatprep.subr.bf16.mxu0 0
  %142 = vmatpush1.bf16.msra.mxu0 0
  %143 = vmatprep.subr.bf16.mxu0 0
  %144 = vmatpush1.bf16.msra.mxu0 0
  %145 = vmatprep.subr.bf16.mxu0 0
  %146 = vmatpush1.bf16.msra.mxu0 0
  %147 = vmatprep.subr.bf16.mxu0 0
  %148 = vmatpush1.bf16.msra.mxu0 0
  %149 = vmatprep.subr.bf16.mxu0 0
  %150 = vmatpush1.bf16.msra.mxu0 0
  %151 = vmatprep.mubr.bf16.mxu0 0
  %152 = vmatmul.mubr.bf16.gmra.mrb[0].mxu0 %v92
  %v153 = vpop.f32.mrb[0].mxu0
  %v154 = vadd.f32 0.0, %v153
  %v155 = vpop.f32.mrb[0].mxu0
  %v156 = vpop.f32.mrb[0].mxu0
  %v157 = vadd.f32 0.0, %v156
  %v158 = vpop.f32.mrb[0].mxu0
  %159 = vmatprep.mubr.bf16.mxu0 0
  %160 = vmatmul.mubr.bf16.gmra.mrb[0].mxu0 %v95
  %v161 = vpop.f32.mrb[0].mxu0
  %v162 = vadd.f32 0.0, %v161
  %v163 = vpop.f32.mrb[0].mxu0
  %v164 = vpop.f32.mrb[0].mxu0
  %v165 = vadd.f32 0.0, %v164
  %v166 = vpop.f32.mrb[0].mxu0
  %167 = vmatprep.mubr.bf16.mxu0 0
  %168 = vmatmul.mubr.bf16.gmra.mrb[0].mxu0 %v98
  %v169 = vpop.f32.mrb[0].mxu0
  %v170 = vadd.f32 0.0, %v169
  %v171 = vpop.f32.mrb[0].mxu0
  %v172 = vpop.f32.mrb[0].mxu0
  %v173 = vadd.f32 0.0, %v172
  %v174 = vpop.f32.mrb[0].mxu0
  %175 = vmatprep.mubr.bf16.mxu0 0
  %176 = vmatmul.mubr.bf16.gmra.mrb[0].mxu0 %v101
  %v177 = vpop.f32.mrb[0].mxu0
  %v178 = vadd.f32 0.0, %v177
  %v179 = vpop.f32.mrb[0].mxu0
  %v180 = vpop.f32.mrb[0].mxu0
  %v181 = vadd.f32 0.0, %v180
  %v182 = vpop.f32.mrb[0].mxu0
  %183 = vmatprep.mubr.bf16.mxu0 0
  %184 = vmatmul.mubr.bf16.gmra.mrb[0].mxu0 %v104
  %v185 = vpop.f32.mrb[0].mxu0
  %v186 = vadd.f32 0.0, %v185
  %v187 = vpop.f32.mrb[0].mxu0
  %v188 = vpop.f32.mrb[0].mxu0
  %v189 = vadd.f32 0.0, %v188
  %v190 = vpop.f32.mrb[0].mxu0
  %191 = vmatprep.mubr.bf16.mxu0 0
  %192 = vmatmul.mubr.bf16.gmra.mrb[0].mxu0 %v107
  %v193 = vpop.f32.mrb[0].mxu0
  %v194 = vadd.f32 0.0, %v193
  %v195 = vpop.f32.mrb[0].mxu0
  %v196 = vpop.f32.mrb[0].mxu0
  %v197 = vadd.f32 0.0, %v196
  %v198 = vpop.f32.mrb[0].mxu0
  %199 = vmatprep.mubr.bf16.mxu0 0
  %200 = vmatmul.mubr.bf16.gmra.mrb[0].mxu0 %v110
  %v201 = vpop.f32.mrb[0].mxu0
  %v202 = vadd.f32 0.0, %v201
  %v203 = vpop.f32.mrb[0].mxu0
  %v204 = vpop.f32.mrb[0].mxu0
  %v205 = vadd.f32 0.0, %v204
  %v206 = vpop.f32.mrb[0].mxu0
  %207 = vmatprep.mubr.bf16.mxu0 0
  %208 = vmatmul.mubr.bf16.gmra.mrb[0].mxu0 %v113
  %v209 = vpop.f32.mrb[0].mxu0
  %v210 = vadd.f32 0.0, %v209
  %v211 = vpop.f32.mrb[0].mxu0
  %v212 = vpop.f32.mrb[0].mxu0
  %v213 = vadd.f32 0.0, %v212
  %v214 = vpop.f32.mrb[0].mxu0
  %215 = vdwg.mxu0
  %v216 = vadd.f32 %v154, %v157
  %v217 = vadd.f32 %v216, %v162
  %v218 = vadd.f32 %v217, %v165
  %v219 = vadd.f32 %v218, %v170
  %v220 = vadd.f32 %v219, %v173
  %v221 = vadd.f32 %v220, %v178
  %v222 = vadd.f32 %v221, %v181
  %v223 = vadd.f32 %v222, %v186
  %v224 = vadd.f32 %v223, %v189
  %v225 = vadd.f32 %v224, %v194
  %v226 = vadd.f32 %v225, %v197
  %v227 = vadd.f32 %v226, %v202
  %v228 = vadd.f32 %v227, %v205
  %v229 = vadd.f32 %v228, %v210
  %v230 = vadd.f32 %v229, %v213
  %v231 = vrot.slane %v230, 4
  %v232 = vadd.f32 %v230, %v231
  %v233 = vrot.slane %v232, 2
  %v234 = vadd.f32 %v232, %v233
  %v235 = vrot.slane %v234, 1
  %v236 = vadd.f32 %v234, %v235
  %v237 = vmul.f32 %v154, %v154
  %v238 = vmul.f32 %v157, %v157
  %v239 = vmul.f32 %v162, %v162
  %v240 = vmul.f32 %v165, %v165
  %v241 = vmul.f32 %v170, %v170
  %v242 = vmul.f32 %v173, %v173
  %v243 = vmul.f32 %v178, %v178
  %v244 = vmul.f32 %v181, %v181
  %v245 = vmul.f32 %v186, %v186
  %v246 = vmul.f32 %v189, %v189
  %v247 = vmul.f32 %v194, %v194
  %v248 = vmul.f32 %v197, %v197
  %v249 = vmul.f32 %v202, %v202
  %v250 = vmul.f32 %v205, %v205
  %v251 = vmul.f32 %v210, %v210
  %v252 = vmul.f32 %v213, %v213
  %v253 = vadd.f32 %v237, %v238
  %v254 = vadd.f32 %v253, %v239
  %v255 = vadd.f32 %v254, %v240
  %v256 = vadd.f32 %v255, %v241
  %v257 = vadd.f32 %v256, %v242
  %v258 = vadd.f32 %v257, %v243
  %v259 = vadd.f32 %v258, %v244
  %v260 = vadd.f32 %v259, %v245
  %v261 = vadd.f32 %v260, %v246
  %v262 = vadd.f32 %v261, %v247
  %v263 = vadd.f32 %v262, %v248
  %v264 = vadd.f32 %v263, %v249
  %v265 = vadd.f32 %v264, %v250
  %v266 = vadd.f32 %v265, %v251
  %v267 = vadd.f32 %v266, %v252
  %v268 = vrot.slane %v267, 4
  %v269 = vadd.f32 %v267, %v268
  %v270 = vrot.slane %v269, 2
  %v271 = vadd.f32 %v269, %v270
  %v272 = vrot.slane %v271, 1
  %v273 = vadd.f32 %v271, %v272
  %274 = vst [vmem:[%s2] sm:$0xff] %v236
  %275 = vst [vmem:[%s3] sm:$0xff] %v273
  // Predicated region
  $region10: #{conv2_forward.2} parent=0 // pred_check
    _
  $region11: #{conv2_forward.2} parent=0 // pred_check_branch
    %277 = sbr.rel (0) target = $region13
  $region12: #{conv2_forward.2} parent=0 // pred_region
    _
  $region13: #{conv2_forward.2} parent=0 // pred_fallthru
    _
  // Predicated region
  $region14: #{conv2_forward.2} parent=0 // pred_check
    _
  $region15: #{conv2_forward.2} parent=0 // pred_check_branch
    %279 = sbr.rel (0) target = $region17
  $region16: #{conv2_forward.2} parent=0 // pred_region
    _
  $region17: #{conv2_forward.2} parent=0 // pred_fallthru
    _
  // Predicated region
  $region18: #{conv2_forward.2} parent=0 // pred_check
    _
  $region19: #{conv2_forward.2} parent=0 // pred_check_branch
    %281 = sbr.rel (0) target = $region21
  $region20: #{conv2_forward.2} parent=0 // pred_region
    _
  $region21: #{conv2_forward.2} parent=0 // pred_fallthru
    _
  // Predicated region
  $region22: #{conv2_forward.2} parent=0 // pred_check
    _
  $region23: #{conv2_forward.2} parent=0 // pred_check_branch
    %283 = sbr.rel (0) target = $region25
  $region24: #{conv2_forward.2} parent=0 // pred_region
    _
  $region25: #{conv2_forward.2} parent=0 // pred_fallthru
    _

// kernel: conv2_forward.3
$region0: #{conv2_forward.3}
  #allocation0 [shape = 'u32[]', space=smem, size = 0x4, offset = 0x4, fixed_abs, tag = 'smem constant byte address 0x4 - core index']
  #allocation1 [shape = 'u32[144,128]{1,0:T(1,128)}', space=vmem, size = 0x12000, scoped, tag = 'internal scratch']
  %s0 = inlined_call_operand.vmem [shape: bf16[128,36], index: 0, kind: input, shape index: {}]
  %s1 = inlined_call_operand.vmem [shape: bf16[36,128], index: 1, kind: input, shape index: {}]
  %s2 = inlined_call_operand.vmem [shape: f32[1,128], index: 2, kind: input, shape index: {}]
  %s3 = inlined_call_operand.vmem [shape: f32[1,128], index: 3, kind: input, shape index: {}]
  %s4 = inlined_call_operand.vmem [shape: f32[128,8], index: 4, kind: output, shape index: {}]
  %s5 = sld [smem:[#allocation0]]
  $region26: #{conv2_forward.3} parent=0
    _
  %s7 = ssub.s32 1, %s5
  %s8 = scalar_select 0, %s7, %s5
  // Predicated region
  $region2: #{conv2_forward.3} parent=0 // pred_check
    _
  $region3: #{conv2_forward.3} parent=0 // pred_check_branch
    %10 = sbr.rel (0) target = $region5
  $region4: #{conv2_forward.3} parent=0 // pred_region
    _
  $region5: #{conv2_forward.3} parent=0 // pred_fallthru
    _
  // Predicated region
  $region6: #{conv2_forward.3} parent=0 // pred_check
    _
  $region7: #{conv2_forward.3} parent=0 // pred_check_branch
    %12 = sbr.rel (0) target = $region9
  $region8: #{conv2_forward.3} parent=0 // pred_region
    _
  $region9: #{conv2_forward.3} parent=0 // pred_fallthru
    _
  // Predicated region
  $region10: #{conv2_forward.3} parent=0 // pred_check
    _
  $region11: #{conv2_forward.3} parent=0 // pred_check_branch
    %14 = sbr.rel (0) target = $region13
  $region12: #{conv2_forward.3} parent=0 // pred_region
    _
  $region13: #{conv2_forward.3} parent=0 // pred_fallthru
    _
  // Predicated region
  $region14: #{conv2_forward.3} parent=0 // pred_check
    _
  $region15: #{conv2_forward.3} parent=0 // pred_check_branch
    %16 = sbr.rel (0) target = $region17
  $region16: #{conv2_forward.3} parent=0 // pred_region
    _
  $region17: #{conv2_forward.3} parent=0 // pred_fallthru
    _
  %v18 = vld [vmem:[%s0] sm:$0xf]
  %v19 = vld [vmem:[%s0 + $0x4] sm:$0xf]
  %v20 = vld [vmem:[%s0 + $0x8] sm:$0xf]
  %v21 = vld [vmem:[%s0 + $0xc] sm:$0xf]
  %v22 = vld [vmem:[%s0 + $0x10] sm:$0xf]
  %v23 = vld [vmem:[%s0 + $0x14] sm:$0xf]
  %v24 = vld [vmem:[%s0 + $0x18] sm:$0xf]
  %v25 = vld [vmem:[%s0 + $0x1c] sm:$0xf]
  %v26 = vld [vmem:[%s0 + $0x20] sm:$0xf]
  %v27 = vld [vmem:[%s0 + $0x24] sm:$0xf]
  %v28 = vld [vmem:[%s0 + $0x28] sm:$0xf]
  %v29 = vld [vmem:[%s0 + $0x2c] sm:$0xf]
  %v30 = vld [vmem:[%s0 + $0x30] sm:$0xf]
  %v31 = vld [vmem:[%s0 + $0x34] sm:$0xf]
  %v32 = vld [vmem:[%s0 + $0x38] sm:$0xf]
  %v33 = vld [vmem:[%s0 + $0x3c] sm:$0xf]
  %v34 = vld [vmem:[%s1] sm:$0xf]
  %v35 = vld [vmem:[%s1 + $0x4] sm:$0xf]
  %v36 = vld [vmem:[%s1 + $0x8] sm:$0xf]
  %v37 = vld [vmem:[%s1 + $0xc] sm:$0xf]
  %v38 = vld [vmem:[%s1 + $0x10] sm:$0x3]
  %v55 = vunpack.c.l.b16 %v18
  %v56 = vunpack.c.l.b16 %v19
  %v57 = vunpack.c.l.b16 %v20
  %v58 = vunpack.c.l.b16 %v21
  %v59 = vunpack.c.l.b16 %v22
  %v60 = vunpack.c.l.b16 %v23
  %v61 = vunpack.c.l.b16 %v24
  %v62 = vunpack.c.l.b16 %v25
  %v63 = vunpack.c.l.b16 %v26
  %v64 = vunpack.c.l.b16 %v27
  %v65 = vunpack.c.l.b16 %v28
  %v66 = vunpack.c.l.b16 %v29
  %v67 = vunpack.c.l.b16 %v30
  %v68 = vunpack.c.l.b16 %v31
  %v69 = vunpack.c.l.b16 %v32
  %v70 = vunpack.c.l.b16 %v33
  %v71 = vpack.c.b16 %v56, %v55
  %v72 = vpack.c.b16 %v58, %v57
  %v73 = vpack.c.b16 %v60, %v59
  %v74 = vpack.c.b16 %v62, %v61
  %v75 = vpack.c.b16 %v64, %v63
  %v76 = vpack.c.b16 %v66, %v65
  %v77 = vpack.c.b16 %v68, %v67
  %v78 = vpack.c.b16 %v70, %v69
  %v84 = vunpack.c.l.b16 %v34
  %v85 = vunpack.c.l.b16 %v35
  %v86 = vunpack.c.l.b16 %v36
  %v87 = vunpack.c.l.b16 %v37
  %v88 = vunpack.c.l.b16 %v38
  %v89 = vpack.c.b16 %v85, %v84
  %v90 = vpack.c.b16 %v87, %v86
  %v91 = vpack.c.b16 %v88, %v88
  %vm94 = vcmask 293888
  %v96 = vsel %vm94, %v71, 0
  %v99 = vsel %vm94, %v72, 0
  %v102 = vsel %vm94, %v73, 0
  %v105 = vsel %vm94, %v74, 0
  %v108 = vsel %vm94, %v75, 0
  %v111 = vsel %vm94, %v76, 0
  %v114 = vsel %vm94, %v77, 0
  %v117 = vsel %vm94, %v78, 0
  %vm119 = vcmask 1041408
  %v121 = vsel %vm119, %v91, 0
  %123 = vmatprep.subr.bf16.mxu0 0
  %124 = vmatpush1.bf16.msra.mxu0 %v89
  %125 = vmatprep.subr.bf16.mxu0 0
  %126 = vmatpush1.bf16.msra.mxu0 %v90
  %127 = vmatprep.subr.bf16.mxu0 0
  %128 = vmatpush1.bf16.msra.mxu0 %v121
  %129 = vmatprep.subr.bf16.mxu0 0
  %130 = vmatpush1.bf16.msra.mxu0 0
  %131 = vmatprep.subr.bf16.mxu0 0
  %132 = vmatpush1.bf16.msra.mxu0 0
  %133 = vmatprep.subr.bf16.mxu0 0
  %134 = vmatpush1.bf16.msra.mxu0 0
  %135 = vmatprep.subr.bf16.mxu0 0
  %136 = vmatpush1.bf16.msra.mxu0 0
  %137 = vmatprep.subr.bf16.mxu0 0
  %138 = vmatpush1.bf16.msra.mxu0 0
  %139 = vmatprep.subr.bf16.mxu0 0
  %140 = vmatpush1.bf16.msra.mxu0 0
  %141 = vmatprep.subr.bf16.mxu0 0
  %142 = vmatpush1.bf16.msra.mxu0 0
  %143 = vmatprep.subr.bf16.mxu0 0
  %144 = vmatpush1.bf16.msra.mxu0 0
  %145 = vmatprep.subr.bf16.mxu0 0
  %146 = vmatpush1.bf16.msra.mxu0 0
  %147 = vmatprep.subr.bf16.mxu0 0
  %148 = vmatpush1.bf16.msra.mxu0 0
  %149 = vmatprep.subr.bf16.mxu0 0
  %150 = vmatpush1.bf16.msra.mxu0 0
  %151 = vmatprep.subr.bf16.mxu0 0
  %152 = vmatpush1.bf16.msra.mxu0 0
  %153 = vmatprep.subr.bf16.mxu0 0
  %154 = vmatpush1.bf16.msra.mxu0 0
  %155 = vmatprep.mubr.bf16.mxu0 0
  %156 = vmatmul.mubr.bf16.gmra.mrb[0].mxu0 %v96
  %v157 = vpop.f32.mrb[0].mxu0
  %v158 = vadd.f32 0.0, %v157
  %v159 = vpop.f32.mrb[0].mxu0
  %v160 = vpop.f32.mrb[0].mxu0
  %v161 = vadd.f32 0.0, %v160
  %v162 = vpop.f32.mrb[0].mxu0
  %163 = vmatprep.mubr.bf16.mxu0 0
  %164 = vmatmul.mubr.bf16.gmra.mrb[0].mxu0 %v99
  %v165 = vpop.f32.mrb[0].mxu0
  %v166 = vadd.f32 0.0, %v165
  %v167 = vpop.f32.mrb[0].mxu0
  %v168 = vpop.f32.mrb[0].mxu0
  %v169 = vadd.f32 0.0, %v168
  %v170 = vpop.f32.mrb[0].mxu0
  %171 = vmatprep.mubr.bf16.mxu0 0
  %172 = vmatmul.mubr.bf16.gmra.mrb[0].mxu0 %v102
  %v173 = vpop.f32.mrb[0].mxu0
  %v174 = vadd.f32 0.0, %v173
  %v175 = vpop.f32.mrb[0].mxu0
  %v176 = vpop.f32.mrb[0].mxu0
  %v177 = vadd.f32 0.0, %v176
  %v178 = vpop.f32.mrb[0].mxu0
  %179 = vmatprep.mubr.bf16.mxu0 0
  %180 = vmatmul.mubr.bf16.gmra.mrb[0].mxu0 %v105
  %v181 = vpop.f32.mrb[0].mxu0
  %v182 = vadd.f32 0.0, %v181
  %v183 = vpop.f32.mrb[0].mxu0
  %v184 = vpop.f32.mrb[0].mxu0
  %v185 = vadd.f32 0.0, %v184
  %v186 = vpop.f32.mrb[0].mxu0
  %187 = vmatprep.mubr.bf16.mxu0 0
  %188 = vmatmul.mubr.bf16.gmra.mrb[0].mxu0 %v108
  %v189 = vpop.f32.mrb[0].mxu0
  %v190 = vadd.f32 0.0, %v189
  %v191 = vpop.f32.mrb[0].mxu0
  %v192 = vpop.f32.mrb[0].mxu0
  %v193 = vadd.f32 0.0, %v192
  %v194 = vpop.f32.mrb[0].mxu0
  %195 = vmatprep.mubr.bf16.mxu0 0
  %196 = vmatmul.mubr.bf16.gmra.mrb[0].mxu0 %v111
  %v197 = vpop.f32.mrb[0].mxu0
  %v198 = vadd.f32 0.0, %v197
  %v199 = vpop.f32.mrb[0].mxu0
  %v200 = vpop.f32.mrb[0].mxu0
  %v201 = vadd.f32 0.0, %v200
  %v202 = vpop.f32.mrb[0].mxu0
  %203 = vmatprep.mubr.bf16.mxu0 0
  %204 = vmatmul.mubr.bf16.gmra.mrb[0].mxu0 %v114
  %v205 = vpop.f32.mrb[0].mxu0
  %v206 = vadd.f32 0.0, %v205
  %v207 = vpop.f32.mrb[0].mxu0
  %v208 = vpop.f32.mrb[0].mxu0
  %v209 = vadd.f32 0.0, %v208
  %v210 = vpop.f32.mrb[0].mxu0
  %211 = vmatprep.mubr.bf16.mxu0 0
  %212 = vmatmul.mubr.bf16.gmra.mrb[0].mxu0 %v117
  %v213 = vpop.f32.mrb[0].mxu0
  %v214 = vadd.f32 0.0, %v213
  %v215 = vpop.f32.mrb[0].mxu0
  %v216 = vpop.f32.mrb[0].mxu0
  %v217 = vadd.f32 0.0, %v216
  %v218 = vpop.f32.mrb[0].mxu0
  %219 = vdwg.mxu0
  %v220 = vld [vmem:[%s2] sm:$0x1]
  %v222 = vlaneseq
  %v223 = vshrl.u32 %v222, 7
  %v224 = vsub.s32 0, %v223
  %v225 = vrot.slane %v220, %v224
  %v227 = vmul.f32 %v158, %v225
  %v228 = vmul.f32 %v161, %v225
  %v229 = vmul.f32 %v166, %v225
  %v230 = vmul.f32 %v169, %v225
  %v231 = vmul.f32 %v174, %v225
  %v232 = vmul.f32 %v177, %v225
  %v233 = vmul.f32 %v182, %v225
  %v234 = vmul.f32 %v185, %v225
  %v235 = vmul.f32 %v190, %v225
  %v236 = vmul.f32 %v193, %v225
  %v237 = vmul.f32 %v198, %v225
  %v238 = vmul.f32 %v201, %v225
  %v239 = vmul.f32 %v206, %v225
  %v240 = vmul.f32 %v209, %v225
  %v241 = vmul.f32 %v214, %v225
  %v242 = vmul.f32 %v217, %v225
  %v243 = vld [vmem:[%s3] sm:$0x1]
  %v245 = vlaneseq
  %v246 = vshrl.u32 %v245, 7
  %v247 = vsub.s32 0, %v246
  %v248 = vrot.slane %v243, %v247
  %v250 = vadd.f32 %v227, %v248
  %v251 = vadd.f32 %v228, %v248
  %v252 = vadd.f32 %v229, %v248
  %v253 = vadd.f32 %v230, %v248
  %v254 = vadd.f32 %v231, %v248
  %v255 = vadd.f32 %v232, %v248
  %v256 = vadd.f32 %v233, %v248
  %v257 = vadd.f32 %v234, %v248
  %v258 = vadd.f32 %v235, %v248
  %v259 = vadd.f32 %v236, %v248
  %v260 = vadd.f32 %v237, %v248
  %v261 = vadd.f32 %v238, %v248
  %v262 = vadd.f32 %v239, %v248
  %v263 = vadd.f32 %v240, %v248
  %v264 = vadd.f32 %v241, %v248
  %v265 = vadd.f32 %v242, %v248
  %vm266 = vcmp.ge.f32.partialorder %v250, 0.0
  %vm267 = vcmp.ge.f32.partialorder %v251, 0.0
  %vm268 = vcmp.ge.f32.partialorder %v252, 0.0
  %vm269 = vcmp.ge.f32.partialorder %v253, 0.0
  %vm270 = vcmp.ge.f32.partialorder %v254, 0.0
  %vm271 = vcmp.ge.f32.partialorder %v255, 0.0
  %vm272 = vcmp.ge.f32.partialorder %v256, 0.0
  %vm273 = vcmp.ge.f32.partialorder %v257, 0.0
  %vm274 = vcmp.ge.f32.partialorder %v258, 0.0
  %vm275 = vcmp.ge.f32.partialorder %v259, 0.0
  %vm276 = vcmp.ge.f32.partialorder %v260, 0.0
  %vm277 = vcmp.ge.f32.partialorder %v261, 0.0
  %vm278 = vcmp.ge.f32.partialorder %v262, 0.0
  %vm279 = vcmp.ge.f32.partialorder %v263, 0.0
  %vm280 = vcmp.ge.f32.partialorder %v264, 0.0
  %vm281 = vcmp.ge.f32.partialorder %v265, 0.0
  %v282 = vmul.f32 %v250, 0.02
  %v283 = vmul.f32 %v251, 0.02
  %v284 = vmul.f32 %v252, 0.02
  %v285 = vmul.f32 %v253, 0.02
  %v286 = vmul.f32 %v254, 0.02
  %v287 = vmul.f32 %v255, 0.02
  %v288 = vmul.f32 %v256, 0.02
  %v289 = vmul.f32 %v257, 0.02
  %v290 = vmul.f32 %v258, 0.02
  %v291 = vmul.f32 %v259, 0.02
  %v292 = vmul.f32 %v260, 0.02
  %v293 = vmul.f32 %v261, 0.02
  %v294 = vmul.f32 %v262, 0.02
  %v295 = vmul.f32 %v263, 0.02
  %v296 = vmul.f32 %v264, 0.02
  %v297 = vmul.f32 %v265, 0.02
  %v298 = vsel %vm266, %v250, %v282
  %v299 = vsel %vm267, %v251, %v283
  %v300 = vsel %vm268, %v252, %v284
  %v301 = vsel %vm269, %v253, %v285
  %v302 = vsel %vm270, %v254, %v286
  %v303 = vsel %vm271, %v255, %v287
  %v304 = vsel %vm272, %v256, %v288
  %v305 = vsel %vm273, %v257, %v289
  %v306 = vsel %vm274, %v258, %v290
  %v307 = vsel %vm275, %v259, %v291
  %v308 = vsel %vm276, %v260, %v292
  %v309 = vsel %vm277, %v261, %v293
  %v310 = vsel %vm278, %v262, %v294
  %v311 = vsel %vm279, %v263, %v295
  %v312 = vsel %vm280, %v264, %v296
  %v313 = vsel %vm281, %v265, %v297
  %vm314 = vcmask 64512
  %315 = vst.msk [vmem:[%s4] sm:$0xff] %vm314, %v298
  %316 = vst.msk [vmem:[%s4 + $0x8] sm:$0xff] %vm314, %v299
  %317 = vst.msk [vmem:[%s4 + $0x10] sm:$0xff] %vm314, %v300
  %318 = vst.msk [vmem:[%s4 + $0x18] sm:$0xff] %vm314, %v301
  %319 = vst.msk [vmem:[%s4 + $0x20] sm:$0xff] %vm314, %v302
  %320 = vst.msk [vmem:[%s4 + $0x28] sm:$0xff] %vm314, %v303
  %321 = vst.msk [vmem:[%s4 + $0x30] sm:$0xff] %vm314, %v304
  %322 = vst.msk [vmem:[%s4 + $0x38] sm:$0xff] %vm314, %v305
  %323 = vst.msk [vmem:[%s4 + $0x40] sm:$0xff] %vm314, %v306
  %324 = vst.msk [vmem:[%s4 + $0x48] sm:$0xff] %vm314, %v307
  %325 = vst.msk [vmem:[%s4 + $0x50] sm:$0xff] %vm314, %v308
  %326 = vst.msk [vmem:[%s4 + $0x58] sm:$0xff] %vm314, %v309
  %327 = vst.msk [vmem:[%s4 + $0x60] sm:$0xff] %vm314, %v310
  %328 = vst.msk [vmem:[%s4 + $0x68] sm:$0xff] %vm314, %v311
  %329 = vst.msk [vmem:[%s4 + $0x70] sm:$0xff] %vm314, %v312
  %330 = vst.msk [vmem:[%s4 + $0x78] sm:$0xff] %vm314, %v313
  // Predicated region
  $region18: #{conv2_forward.3} parent=0 // pred_check
    _
  $region19: #{conv2_forward.3} parent=0 // pred_check_branch
    %332 = sbr.rel (0) target = $region21
  $region20: #{conv2_forward.3} parent=0 // pred_region
    _
  $region21: #{conv2_forward.3} parent=0 // pred_fallthru
    _
  // Predicated region
  $region22: #{conv2_forward.3} parent=0 // pred_check
    _
  $region23: #{conv2_forward.3} parent=0 // pred_check_branch
    %334 = sbr.rel (0) target = $region25
  $region24: #{conv2_forward.3} parent=0 // pred_region
    _
  $region25: #{conv2_forward.3} parent=0 // pred_fallthru
    _

</llo_original>
